<compile_context>
chip_gen: v7x
topology: tpu7x:2x2x1
jax: 0.10.0
libtpu: 0.0.40
codegen_flags: <defaults>
</compile_context>

<pallas_src>
import functools

import jax
import jax.numpy as jnp
import numpy as np
from jax import lax
from jax.experimental import pallas as pl
from jax.experimental.pallas import tpu as pltpu


# ---------------------------------------------------------------------------
# Kernel: one grid step processes B images.
#
#   x_ref : (B, H, W*Cin)        lane-dense NHWC view of B input images
#   w_ref : (W*Cin, 3*W*Cout)    horizontal blur (*) conv taps (banded), dy blocks
#                                stacked along columns; column padding folded in
#   a_ref : (3, H, H)            vertical blur (*) dy row-shift (*) row masks
#   b_ref : (1, W*Cout)          bias tiled across W
#   o_ref : (B, H, W*Cout)       lane-dense NHWC view of the outputs
# ---------------------------------------------------------------------------
def _blurpool_conv_kernel(x_ref, w_ref, a_ref, b_ref, o_ref, *, B, H, W, Cin, Cout):
    f32 = jnp.float32
    WC = W * Cin
    WO = W * Cout

    # One big matmul: all horizontal work (blur taps, conv taps, both column
    # zero-paddings) lives inside w_ref.  M = B*H.
    xall = x_ref[...].reshape(B * H, WC).astype(f32)
    y = jnp.dot(xall, w_ref[...].astype(f32),
                preferred_element_type=f32)                 # (B*H, 3*WO)

    bias = b_ref[...].astype(f32)                           # (1, WO)
    a0 = a_ref[0].astype(f32)
    a1 = a_ref[1].astype(f32)
    a2 = a_ref[2].astype(f32)

    # Vertical composition per image: out_i = sum_dy a[dy] @ y_i[:, dy-block].
    # Row offsets are multiples of H (H % 8 == 0 here) and lane offsets are
    # multiples of WO (= 128 here) -> all slices are (8,128)-aligned.
    for i in range(B):                                      # B is a small static const
        r0 = i * H
        acc = jnp.dot(a0, y[r0:r0 + H, 0:WO], preferred_element_type=f32)
        acc = acc + jnp.dot(a1, y[r0:r0 + H, WO:2 * WO], preferred_element_type=f32)
        acc = acc + jnp.dot(a2, y[r0:r0 + H, 2 * WO:3 * WO], preferred_element_type=f32)
        o_ref[i] = (acc + bias).astype(o_ref.dtype)


# ---------------------------------------------------------------------------
# Wrapper helpers.
# ---------------------------------------------------------------------------
def _compose_weights(conv_w, conv_b, H, W):
    """Exactly fold the fixed [1,2,1]x[1,2,1]/16 blur (incl. its zero padding)
    and the conv's zero padding into banded matrices.

    Coefficient identity (cross-correlation, matching F.conv2d / lax.conv):
      out[i,j,co] = b[co] + sum_{dy,s,xi,ci} av[dy][i,s] * wh[dy][(xi,ci),(j,co)] * x[s,xi,ci]
      av[dy][i,s]            = g[s-i-dy+2] * 1[0<=s-i-dy+2<=2] * 1[0<=i+dy-1<H]
      wh[dy][(xi,ci),(j,co)] = sum_dx conv_w[co,ci,dy,dx] * g[xi-j+2-dx]
                                      * 1[0<=xi-j+2-dx<=2] * 1[0<=j+dx-1<W]
    with g = [1,2,1]/4.
    """
    Cout, Cin = conv_w.shape[0], conv_w.shape[1]
    g = jnp.array([1.0, 2.0, 1.0], jnp.float32) / 4.0
    w_hwio = jnp.transpose(conv_w, (2, 3, 1, 0)).astype(jnp.float32)  # (3,3,Cin,Cout)

    # Horizontal banded weights, dy blocks stacked along columns.
    xi = jnp.arange(W)[:, None, None]
    jo = jnp.arange(W)[None, :, None]
    dx = jnp.arange(3)[None, None, :]
    v = xi - jo + 2 - dx
    valid_h = (v >= 0) & (v <= 2) & (jo + dx - 1 >= 0) & (jo + dx - 1 <= W - 1)
    gcoef = jnp.where(valid_h, g[jnp.clip(v, 0, 2)], 0.0)             # (W, W, 3)
    wh = jnp.einsum("xjd,udio->uxijo", gcoef, w_hwio)                 # (3,W,Cin,W,Cout)
    wh = wh.reshape(3, W * Cin, W * Cout)
    wwide = jnp.transpose(wh, (1, 0, 2)).reshape(W * Cin, 3 * W * Cout)

    # Vertical blur / shift / mask matrices.
    dy = jnp.arange(3)[:, None, None]
    io = jnp.arange(H)[None, :, None]
    so = jnp.arange(H)[None, None, :]
    u = so - io - dy + 2
    valid_v = (u >= 0) & (u <= 2) & (io + dy - 1 >= 0) & (io + dy - 1 <= H - 1)
    av = jnp.where(valid_v, g[jnp.clip(u, 0, 2)], 0.0)                # (3, H, H)

    brow = jnp.tile(conv_b.astype(jnp.float32), W).reshape(1, W * Cout)
    return wwide, av, brow


def _pick_images_per_step(N, H, target_rows=256):
    """Batch images per grid step (raise matmul M / per-step DMA) while keeping
    >= 2 grid steps when N >= 2 so both v7x TensorCores are busy."""
    b = max(1, min(N, max(1, target_rows // max(H, 1))))
    if N >= 2:
        b = min(b, max(1, N // 2))
    while N % b:
        b -= 1
    return b


def blurpool_conv2d(x_nchw, conv_w, conv_b):
    """BlurPoolConv2d forward.  x_nchw: (N, Cin, H, W); conv_w: (Cout, Cin, 3, 3)."""
    N, Cin, H, W = x_nchw.shape
    Cout = conv_w.shape[0]
    WC, WO = W * Cin, W * Cout

    # NCHW -> lane-dense (N, H, W*Cin).  Pure layout glue; a caller that already
    # holds NHWC activations can feed them straight through.
    x2 = jnp.transpose(x_nchw, (0, 2, 3, 1)).reshape(N, H, WC)

    wwide, av, brow = _compose_weights(conv_w, conv_b, H, W)

    B = _pick_images_per_step(N, H)
    grid = (N // B,)

    kernel = functools.partial(_blurpool_conv_kernel,
                               B=B, H=H, W=W, Cin=Cin, Cout=Cout)

    out2 = pl.pallas_call(
        kernel,
        out_shape=jax.ShapeDtypeStruct((N, H, WO), x_nchw.dtype),
        grid_spec=pltpu.PrefetchScalarGridSpec(
            num_scalar_prefetch=0,
            grid=grid,
            in_specs=[
                pl.BlockSpec((B, H, WC), lambda n: (n, 0, 0)),
                # Grid-invariant operands (constant index_map -> fetched once).
                # At large W, add pipeline_mode=pl.Buffered(1) and re-budget
                # VMEM for v7x's 64 MiB; trivial at ~100 KB here.
                pl.BlockSpec((WC, 3 * WO), lambda n: (0, 0)),
                pl.BlockSpec((3, H, H), lambda n: (0, 0, 0)),
                pl.BlockSpec((1, WO), lambda n: (0, 0)),
            ],
            out_specs=pl.BlockSpec((B, H, WO), lambda n: (n, 0, 0)),
        ),
        compiler_params=pltpu.CompilerParams(
            dimension_semantics=("parallel",)),
    )(x2, wwide, av, brow)

    # (N, H, W*Cout) -> NCHW.  Pure layout glue.
    return jnp.transpose(out2.reshape(N, H, W, Cout), (0, 3, 1, 2))


# ---------------------------------------------------------------------------
# Pure-JAX reference (same math via lax.conv) for the correctness check.
# ---------------------------------------------------------------------------
def _reference(x_nchw, conv_w, conv_b):
    Cin = x_nchw.shape[1]
    base = jnp.array([[1., 2., 1.], [2., 4., 2.], [1., 2., 1.]],
                     jnp.float32) / 16.0
    blur_filt = jnp.tile(base[None, None], (Cin, 1, 1, 1))  # (Cin,1,3,3)
    blurred = lax.conv_general_dilated(
        x_nchw, blur_filt, window_strides=(1, 1), padding=((1, 1), (1, 1)),
        feature_group_count=Cin,
        dimension_numbers=("NCHW", "OIHW", "NCHW"))
    out = lax.conv_general_dilated(
        blurred, conv_w, window_strides=(1, 1), padding=((1, 1), (1, 1)),
        dimension_numbers=("NCHW", "OIHW", "NCHW"))
    return out + conv_b[None, :, None, None]


if __name__ == "__main__":
    key = jax.random.PRNGKey(0)
    k_x, k_w, k_b = jax.random.split(key, 3)

    N, Cin, H, W, Cout = 2, 4, 16, 16, 8
    x = jax.random.normal(k_x, (N, Cin, H, W), jnp.float32)

    # Deterministic synthetic conv params (Conv2d(4, 8, 3, padding=1, bias=True)).
    fan_in = Cin * 3 * 3
    bound = 1.0 / np.sqrt(fan_in)
    conv_w = jax.random.uniform(k_w, (Cout, Cin, 3, 3), jnp.float32,
                                minval=-bound, maxval=bound)
    conv_b = jax.random.uniform(k_b, (Cout,), jnp.float32,
                                minval=-bound, maxval=bound)

    out = jax.jit(blurpool_conv2d)(x, conv_w, conv_b)
    out = jax.block_until_ready(out)

    ref = _reference(x, conv_w, conv_b)
    np.testing.assert_allclose(np.asarray(out), np.asarray(ref),
                               rtol=1e-5, atol=5e-5)

    print("KERNEL_OK")
</pallas_src>

<mosaic_0001>
module attributes {stable_mosaic.version = 11 : i64} {
  func.func @_blurpool_conv_kernel(%arg0: i32, %arg1: memref<1x16x64xf32, #tpu.memory_space<vmem>>, %arg2: memref<64x384xf32, #tpu.memory_space<vmem>>, %arg3: memref<3x16x16xf32, #tpu.memory_space<vmem>>, %arg4: memref<1x128xf32, #tpu.memory_space<vmem>>, %arg5: memref<1x16x128xf32, #tpu.memory_space<vmem>>) attributes {dimension_semantics = [#tpu.dimension_semantics<parallel>], iteration_bounds = array<i64: 2>, scalar_prefetch = 0 : i64, scratch_operands = 0 : i64, tpu.core_type = #tpu.core_type<tc>, window_params = [{transform_indices = @transform_0, window_bounds = array<i64: 1, 16, 64>}, {pipeline_mode = #tpu.pipeline_mode<synchronous>, transform_indices = @transform_1, window_bounds = array<i64: 64, 384>}, {pipeline_mode = #tpu.pipeline_mode<synchronous>, transform_indices = @transform_2, window_bounds = array<i64: 3, 16, 16>}, {pipeline_mode = #tpu.pipeline_mode<synchronous>, transform_indices = @transform_3, window_bounds = array<i64: 1, 128>}, {transform_indices = @transform_4, window_bounds = array<i64: 1, 16, 128>}]} {
    %c0 = arith.constant 0 : index
    %c0_0 = arith.constant 0 : index
    %c0_1 = arith.constant 0 : index
    %0 = vector.load %arg1[%c0, %c0_0, %c0_1] : memref<1x16x64xf32, #tpu.memory_space<vmem>>, vector<1x16x64xf32>
    %1 = vector.shape_cast %0 : vector<1x16x64xf32> to vector<16x64xf32>
    %c0_2 = arith.constant 0 : index
    %c0_3 = arith.constant 0 : index
    %2 = vector.load %arg2[%c0_2, %c0_3] : memref<64x384xf32, #tpu.memory_space<vmem>>, vector<64x384xf32>
    %cst = arith.constant dense<0.000000e+00> : vector<16x384xf32>
    %3 = tpu.matmul %1, %2, %cst {dimension_numbers = #tpu.dot_dimension_numbers<[1], [0], [0], [1], [0, 0, 1, 1], [], []>} : vector<16x64xf32>, vector<64x384xf32>, vector<16x384xf32> -> vector<16x384xf32>
    %c0_4 = arith.constant 0 : index
    %c0_5 = arith.constant 0 : index
    %4 = vector.load %arg4[%c0_4, %c0_5] : memref<1x128xf32, #tpu.memory_space<vmem>>, vector<1x128xf32>
    %c0_6 = arith.constant 0 : index
    %c0_7 = arith.constant 0 : index
    %c0_8 = arith.constant 0 : index
    %5 = vector.load %arg3[%c0_6, %c0_7, %c0_8] : memref<3x16x16xf32, #tpu.memory_space<vmem>>, vector<1x16x16xf32>
    %6 = vector.shape_cast %5 : vector<1x16x16xf32> to vector<16x16xf32>
    %c1 = arith.constant 1 : index
    %c0_9 = arith.constant 0 : index
    %c0_10 = arith.constant 0 : index
    %7 = vector.load %arg3[%c1, %c0_9, %c0_10] : memref<3x16x16xf32, #tpu.memory_space<vmem>>, vector<1x16x16xf32>
    %8 = vector.shape_cast %7 : vector<1x16x16xf32> to vector<16x16xf32>
    %c2 = arith.constant 2 : index
    %c0_11 = arith.constant 0 : index
    %c0_12 = arith.constant 0 : index
    %9 = vector.load %arg3[%c2, %c0_11, %c0_12] : memref<3x16x16xf32, #tpu.memory_space<vmem>>, vector<1x16x16xf32>
    %10 = vector.shape_cast %9 : vector<1x16x16xf32> to vector<16x16xf32>
    %11 = vector.extract_strided_slice %3 {offsets = [0, 0], sizes = [16, 128], strides = [1, 1]} : vector<16x384xf32> to vector<16x128xf32>
    %cst_13 = arith.constant dense<0.000000e+00> : vector<16x128xf32>
    %12 = tpu.matmul %6, %11, %cst_13 {dimension_numbers = #tpu.dot_dimension_numbers<[1], [0], [0], [1], [0, 0, 1, 1], [], []>} : vector<16x16xf32>, vector<16x128xf32>, vector<16x128xf32> -> vector<16x128xf32>
    %13 = vector.extract_strided_slice %3 {offsets = [0, 128], sizes = [16, 128], strides = [1, 1]} : vector<16x384xf32> to vector<16x128xf32>
    %cst_14 = arith.constant dense<0.000000e+00> : vector<16x128xf32>
    %14 = tpu.matmul %8, %13, %cst_14 {dimension_numbers = #tpu.dot_dimension_numbers<[1], [0], [0], [1], [0, 0, 1, 1], [], []>} : vector<16x16xf32>, vector<16x128xf32>, vector<16x128xf32> -> vector<16x128xf32>
    %15 = arith.addf %12, %14 : vector<16x128xf32>
    %16 = vector.extract_strided_slice %3 {offsets = [0, 256], sizes = [16, 128], strides = [1, 1]} : vector<16x384xf32> to vector<16x128xf32>
    %cst_15 = arith.constant dense<0.000000e+00> : vector<16x128xf32>
    %17 = tpu.matmul %10, %16, %cst_15 {dimension_numbers = #tpu.dot_dimension_numbers<[1], [0], [0], [1], [0, 0, 1, 1], [], []>} : vector<16x16xf32>, vector<16x128xf32>, vector<16x128xf32> -> vector<16x128xf32>
    %18 = arith.addf %15, %17 : vector<16x128xf32>
    %19 = vector.broadcast %4 : vector<1x128xf32> to vector<16x128xf32>
    %20 = arith.addf %18, %19 : vector<16x128xf32>
    %c0_16 = arith.constant 0 : index
    %c0_17 = arith.constant 0 : index
    %c0_18 = arith.constant 0 : index
    %21 = vector.load %arg5[%c0_16, %c0_17, %c0_18] : memref<1x16x128xf32, #tpu.memory_space<vmem>>, vector<1x16x128xf32>
    %22 = vector.shape_cast %21 : vector<1x16x128xf32> to vector<16x128xf32>
    %23 = vector.shape_cast %20 : vector<16x128xf32> to vector<1x16x128xf32>
    tpu.vector_store %arg5[%c0_16, %c0_17, %c0_18], %23 {strides = array<i32>} : memref<1x16x128xf32, #tpu.memory_space<vmem>>, vector<1x16x128xf32>,
    return
  }
  func.func @transform_0(%arg0: i32) -> (i32, i32, i32) {
    %c0_i32 = arith.constant 0 : i32
    %c0_i32_0 = arith.constant 0 : i32
    %c0_i32_1 = arith.constant 0 : i32
    return %arg0, %c0_i32, %c0_i32_0 : i32, i32, i32
  }
  func.func @transform_1(%arg0: i32) -> (i32, i32) {
    %c0_i32 = arith.constant 0 : i32
    %c0_i32_0 = arith.constant 0 : i32
    %c0_i32_1 = arith.constant 0 : i32
    return %c0_i32, %c0_i32_0 : i32, i32
  }
  func.func @transform_2(%arg0: i32) -> (i32, i32, i32) {
    %c0_i32 = arith.constant 0 : i32
    %c0_i32_0 = arith.constant 0 : i32
    %c0_i32_1 = arith.constant 0 : i32
    %c0_i32_2 = arith.constant 0 : i32
    return %c0_i32, %c0_i32_0, %c0_i32_1 : i32, i32, i32
  }
  func.func @transform_3(%arg0: i32) -> (i32, i32) {
    %c0_i32 = arith.constant 0 : i32
    %c0_i32_0 = arith.constant 0 : i32
    %c0_i32_1 = arith.constant 0 : i32
    return %c0_i32, %c0_i32_0 : i32, i32
  }
  func.func @transform_4(%arg0: i32) -> (i32, i32, i32) {
    %c0_i32 = arith.constant 0 : i32
    %c0_i32_0 = arith.constant 0 : i32
    %c0_i32_1 = arith.constant 0 : i32
    return %arg0, %c0_i32, %c0_i32_0 : i32, i32, i32
  }
}

</mosaic_0001>

<llo_original>
// kernel: tile.8
$region0: #{tile.8}
  #allocation0 [shape = 's32[1]{0}', space=sflag, size = 0x4, scoped, tag = 'scoped memory for tile.8']
  %s0 = inlined_call_operand.vmem [shape: f32[8], index: 0, kind: input, shape index: {}]
  %s1 = inlined_call_operand.vmem [shape: f32[16,8], index: 1, kind: output, shape index: {}]
  // Predicated region
  $region2: #{tile.8} parent=0 // pred_check
    _
  $region3: #{tile.8} parent=0 // pred_check_branch
    %3 = sbr.rel (0) target = $region5
  $region4: #{tile.8} parent=0 // pred_region
    _
  $region5: #{tile.8} parent=0 // pred_fallthru
    _
  %v4 = vld [vmem:[%s0] ss:$0 sm:$0xff]
  %5 = vst [vmem:[%s1] sm:$0xff] %v4
  %s6 = scalar_lea.vmem %s1, 8
  %7 = vst [vmem:[%s6] sm:$0xff] %v4

// kernel: tile.9
$region0: #{tile.9}
  %s0 = inlined_call_operand.vmem [shape: f32[16,8], index: 0, kind: input, shape index: {}]
  %s1 = inlined_call_operand.vmem [shape: f32[1,128], index: 1, kind: output, shape index: {}]
  $region1: #{tile.9} parent=0
    #allocation0 [shape = 'u8[4096]{0}', space=vmem, size = 0x1000, scoped, tag = 'scoped mem for output reshape']
    %v2 = vld [vmem:[%s0] sm:$0x1]
    %vm3 = vcmask 64512
    %4 = vst.msk [vmem:[#allocation0] sm:$0x1] %vm3, %v2
    %s5 = scalar_lea.vmem %s0, 15
    %v6 = vld [vmem:[%s5] sm:$0x1]
    %7 = vrot.lane.b32.xlu0 %v6, 120
    %v8 = vpop.permute.xlu0 %7
    %vm9 = vcmask 1048512
    %10 = vst.msk [vmem:[#allocation0] sm:$0x1] %vm9, %v8
    %s11 = scalar_lea.vmem %s0, 14
    %v12 = vld [vmem:[%s11] sm:$0x1]
    %13 = vrot.lane.b32.xlu0 %v12, 112
    %v14 = vpop.permute.xlu0 %13
    %vm15 = vcmask 982912
    %16 = vst.msk [vmem:[#allocation0] sm:$0x1] %vm15, %v14
    %s17 = scalar_lea.vmem %s0, 13
    %v18 = vld [vmem:[%s17] sm:$0x1]
    %19 = vrot.lane.b32.xlu0 %v18, 104
    %v20 = vpop.permute.xlu0 %19
    %vm21 = vcmask 917312
    %22 = vst.msk [vmem:[#allocation0] sm:$0x1] %vm21, %v20
    %s23 = scalar_lea.vmem %s0, 12
    %v24 = vld [vmem:[%s23] sm:$0x1]
    %25 = vrot.lane.b32.xlu0 %v24, 96
    %v26 = vpop.permute.xlu0 %25
    %vm27 = vcmask 851712
    %28 = vst.msk [vmem:[#allocation0] sm:$0x1] %vm27, %v26
    %s29 = scalar_lea.vmem %s0, 11
    %v30 = vld [vmem:[%s29] sm:$0x1]
    %31 = vrot.lane.b32.xlu0 %v30, 88
    %v32 = vpop.permute.xlu0 %31
    %vm33 = vcmask 786112
    %34 = vst.msk [vmem:[#allocation0] sm:$0x1] %vm33, %v32
    %s35 = scalar_lea.vmem %s0, 10
    %v36 = vld [vmem:[%s35] sm:$0x1]
    %37 = vrot.lane.b32.xlu0 %v36, 80
    %v38 = vpop.permute.xlu0 %37
    %vm39 = vcmask 720512
    %40 = vst.msk [vmem:[#allocation0] sm:$0x1] %vm39, %v38
    %s41 = scalar_lea.vmem %s0, 9
    %v42 = vld [vmem:[%s41] sm:$0x1]
    %43 = vrot.lane.b32.xlu0 %v42, 72
    %v44 = vpop.permute.xlu0 %43
    %vm45 = vcmask 654912
    %46 = vst.msk [vmem:[#allocation0] sm:$0x1] %vm45, %v44
    %s47 = scalar_lea.vmem %s0, 8
    %v48 = vld [vmem:[%s47] sm:$0x1]
    %49 = vrot.lane.b32.xlu0 %v48, 64
    %v50 = vpop.permute.xlu0 %49
    %vm51 = vcmask 589312
    %52 = vst.msk [vmem:[#allocation0] sm:$0x1] %vm51, %v50
    %s53 = scalar_lea.vmem %s0, 7
    %v54 = vld [vmem:[%s53] sm:$0x1]
    %55 = vrot.lane.b32.xlu0 %v54, 56
    %v56 = vpop.permute.xlu0 %55
    %vm57 = vcmask 523712
    %58 = vst.msk [vmem:[#allocation0] sm:$0x1] %vm57, %v56
    %s59 = scalar_lea.vmem %s0, 6
    %v60 = vld [vmem:[%s59] sm:$0x1]
    %61 = vrot.lane.b32.xlu0 %v60, 48
    %v62 = vpop.permute.xlu0 %61
    %vm63 = vcmask 458112
    %64 = vst.msk [vmem:[#allocation0] sm:$0x1] %vm63, %v62
    %s65 = scalar_lea.vmem %s0, 5
    %v66 = vld [vmem:[%s65] sm:$0x1]
    %67 = vrot.lane.b32.xlu0 %v66, 40
    %v68 = vpop.permute.xlu0 %67
    %vm69 = vcmask 392512
    %70 = vst.msk [vmem:[#allocation0] sm:$0x1] %vm69, %v68
    %s71 = scalar_lea.vmem %s0, 4
    %v72 = vld [vmem:[%s71] sm:$0x1]
    %73 = vrot.lane.b32.xlu0 %v72, 32
    %v74 = vpop.permute.xlu0 %73
    %vm75 = vcmask 326912
    %76 = vst.msk [vmem:[#allocation0] sm:$0x1] %vm75, %v74
    %s77 = scalar_lea.vmem %s0, 3
    %v78 = vld [vmem:[%s77] sm:$0x1]
    %79 = vrot.lane.b32.xlu0 %v78, 24
    %v80 = vpop.permute.xlu0 %79
    %vm81 = vcmask 261312
    %82 = vst.msk [vmem:[#allocation0] sm:$0x1] %vm81, %v80
    %s83 = scalar_lea.vmem %s0, 2
    %v84 = vld [vmem:[%s83] sm:$0x1]
    %85 = vrot.lane.b32.xlu0 %v84, 16
    %v86 = vpop.permute.xlu0 %85
    %vm87 = vcmask 195712
    %88 = vst.msk [vmem:[#allocation0] sm:$0x1] %vm87, %v86
    %s89 = scalar_lea.vmem %s0, 1
    %v90 = vld [vmem:[%s89] sm:$0x1]
    %91 = vrot.lane.b32.xlu0 %v90, 8
    %v92 = vpop.permute.xlu0 %91
    %vm93 = vcmask 130112
    %94 = vst.msk [vmem:[#allocation0] sm:$0x1] %vm93, %v92
    %s96 = sshllo.u32 0, 1
    %v98 = vld [vmem:[#allocation0] sm:%s96]
    %s99 = sshllo.u32 0, 1
    %100 = vst [vmem:[%s1] sm:%s99] %v98

// kernel: blurpool_conv2d.1
$region0: #{blurpool_conv2d.1}
  #allocation0 [shape = 'u32[]', space=smem, size = 0x4, offset = 0x4, fixed_abs, tag = 'smem constant byte address 0x4 - core index']
  #allocation1 [shape = 'u32[144,128]{1,0:T(1,128)}', space=vmem, size = 0x12000, scoped, tag = 'internal scratch']
  %s0 = inlined_call_operand.vmem [shape: f32[2,16,64], index: 0, kind: input, shape index: {}]
  %s1 = inlined_call_operand.vmem [shape: f32[64,384], index: 1, kind: input, shape index: {}]
  %s2 = inlined_call_operand.vmem [shape: f32[3,16,16], index: 2, kind: input, shape index: {}]
  %s3 = inlined_call_operand.vmem [shape: f32[1,128], index: 3, kind: input, shape index: {}]
  %s4 = inlined_call_operand.vmem [shape: f32[2,16,128], index: 4, kind: output, shape index: {}]
  %s5 = sld [smem:[#allocation0]]
  $region49: #{blurpool_conv2d.1} parent=0
    _
  %s7 = ssub.s32 1, %s5
  %s8 = scalar_select 0, %s7, %s5
  loop: start=0, step=1, limit=4
  $region2: #{blurpool_conv2d.1} parent=0 // loop_pre_header
    _
  $region3: #{blurpool_conv2d.1} parent=0 // loop_header
    %s10 = sphi 0, %s14
    %p11 = scmp.ge.s32.totalorder %s10, 4
    %s20 = sphi 0, %s22
    %s23 = sphi 0, %s20
    %s24 = sphi 0, %s23
    %s40 = sphi 0, %s24
    %s44 = sphi 0, %s44
    %s46 = sphi 0, %s44
    %s47 = sphi 0, %s46
    %s61 = sphi 0, %s47
    %s65 = sphi 0, %s65
    %s67 = sphi 0, %s65
    %s68 = sphi 0, %s67
    %s82 = sphi 0, %s68
    %s86 = sphi 0, %s86
    %s88 = sphi 0, %s86
    %s89 = sphi 0, %s88
    %s103 = sphi 0, %s89
    %s109 = sphi 0, %s111
    %s112 = sphi 0, %s109
    %s113 = sphi 0, %s112
    %s129 = sphi 0, %s113
  $region4: #{blurpool_conv2d.1} parent=0 // loop_header_branch
    %13 = sbr.rel (%p11) target = $region8
  $region5: #{blurpool_conv2d.1} parent=0 // loop_body
    %s15 = ssub.s32 %s10, 1
    %s16 = ssub.s32 %s10, 2
    %s17 = sadd.s32 %s10, 1
    %s18 = ssub.s32 %s10, %s17
    %p19 = scmp.eq.s32.totalorder %s18, 0
    %s21 = sadd.s32 %s20, 1
    %s22 = scalar_select %p19, %s20, %s21
    %p25 = pneg %p19
    %p26 = scmp.eq.s32.totalorder %s10, 1
    %p27 = por %p25, %p26
    %p28 = scmp.ne.s32.totalorder %s20, %s23
    %p29 = scmp.eq.s32.totalorder %s10, 0
    %p30 = por %p28, %p29
    %p31 = scmp.ne.s32.totalorder %s20, %s23
    %p32 = scmp.eq.s32.totalorder %s15, 1
    %p33 = por %p31, %p32
    %p34 = scmp.ne.s32.totalorder %s23, %s24
    %p35 = scmp.eq.s32.totalorder %s15, 0
    %p36 = por %p34, %p35
    %p37 = scmp.ne.s32.totalorder %s23, %s24
    %p38 = scmp.eq.s32.totalorder %s16, 1
    %p39 = por %p37, %p38
    %p41 = scmp.ne.s32.totalorder %s24, %s40
    %p42 = scmp.eq.s32.totalorder %s16, 0
    %p43 = por %p41, %p42
    %s45 = sadd.s32 %s44, 1
    %p48 = scmp.eq.s32.totalorder %s10, 1
    %p49 = scmp.ne.s32.totalorder %s44, %s46
    %p50 = scmp.eq.s32.totalorder %s10, 0
    %p51 = por %p49, %p50
    %p52 = scmp.ne.s32.totalorder %s44, %s46
    %p53 = scmp.eq.s32.totalorder %s15, 1
    %p54 = por %p52, %p53
    %p55 = scmp.ne.s32.totalorder %s46, %s47
    %p56 = scmp.eq.s32.totalorder %s15, 0
    %p57 = por %p55, %p56
    %p58 = scmp.ne.s32.totalorder %s46, %s47
    %p59 = scmp.eq.s32.totalorder %s16, 1
    %p60 = por %p58, %p59
    %p62 = scmp.ne.s32.totalorder %s47, %s61
    %p63 = scmp.eq.s32.totalorder %s16, 0
    %p64 = por %p62, %p63
    %s66 = sadd.s32 %s65, 1
    %p69 = scmp.eq.s32.totalorder %s10, 1
    %p70 = scmp.ne.s32.totalorder %s65, %s67
    %p71 = scmp.eq.s32.totalorder %s10, 0
    %p72 = por %p70, %p71
    %p73 = scmp.ne.s32.totalorder %s65, %s67
    %p74 = scmp.eq.s32.totalorder %s15, 1
    %p75 = por %p73, %p74
    %p76 = scmp.ne.s32.totalorder %s67, %s68
    %p77 = scmp.eq.s32.totalorder %s15, 0
    %p78 = por %p76, %p77
    %p79 = scmp.ne.s32.totalorder %s67, %s68
    %p80 = scmp.eq.s32.totalorder %s16, 1
    %p81 = por %p79, %p80
    %p83 = scmp.ne.s32.totalorder %s68, %s82
    %p84 = scmp.eq.s32.totalorder %s16, 0
    %p85 = por %p83, %p84
    %s87 = sadd.s32 %s86, 1
    %p90 = scmp.eq.s32.totalorder %s10, 1
    %p91 = scmp.ne.s32.totalorder %s86, %s88
    %p92 = scmp.eq.s32.totalorder %s10, 0
    %p93 = por %p91, %p92
    %p94 = scmp.ne.s32.totalorder %s86, %s88
    %p95 = scmp.eq.s32.totalorder %s15, 1
    %p96 = por %p94, %p95
    %p97 = scmp.ne.s32.totalorder %s88, %s89
    %p98 = scmp.eq.s32.totalorder %s15, 0
    %p99 = por %p97, %p98
    %p100 = scmp.ne.s32.totalorder %s88, %s89
    %p101 = scmp.eq.s32.totalorder %s16, 1
    %p102 = por %p100, %p101
    %p104 = scmp.ne.s32.totalorder %s89, %s103
    %p105 = scmp.eq.s32.totalorder %s16, 0
    %p106 = por %p104, %p105
    %s107 = ssub.s32 %s10, %s17
    %p108 = scmp.eq.s32.totalorder %s107, 0
    %s110 = sadd.s32 %s109, 1
    %s111 = scalar_select %p108, %s109, %s110
    %p114 = pneg %p108
    %p115 = scmp.eq.s32.totalorder %s10, 1
    %p116 = por %p114, %p115
    %p117 = scmp.ne.s32.totalorder %s109, %s112
    %p118 = scmp.eq.s32.totalorder %s10, 0
    %p119 = por %p117, %p118
    %p120 = scmp.ne.s32.totalorder %s109, %s112
    %p121 = scmp.eq.s32.totalorder %s15, 1
    %p122 = por %p120, %p121
    %p123 = scmp.ne.s32.totalorder %s112, %s113
    %p124 = scmp.eq.s32.totalorder %s15, 0
    %p125 = por %p123, %p124
    %p126 = scmp.ne.s32.totalorder %s112, %s113
    %p127 = scmp.eq.s32.totalorder %s16, 1
    %p128 = por %p126, %p127
    %p130 = scmp.ne.s32.totalorder %s113, %s129
    %p131 = scmp.eq.s32.totalorder %s16, 0
    %p132 = por %p130, %p131
    %p133 = scmp.le.s32.totalorder 1, %s10
    %p134 = scmp.lt.s32.totalorder %s10, 3
    %p135 = pnand %p133, %p134
    %p136 = pneg %p135
    // Predicated region
    $region9: #{blurpool_conv2d.1} parent=5 // pred_check
      _
    $region10: #{blurpool_conv2d.1} parent=5 // pred_check_branch
      %138 = sbr.rel (%p135) target = $region12
    $region11: #{blurpool_conv2d.1} parent=5 // pred_region
      %s139 = ssub.s32 %s10, 1
      // Predicated region
      $region13: #{blurpool_conv2d.1} parent=11 // pred_check
        %p140 = pneg %p57
      $region14: #{blurpool_conv2d.1} parent=11 // pred_check_branch
        %142 = sbr.rel (%p140) target = $region16
      $region15: #{blurpool_conv2d.1} parent=11 // pred_region
        _
      $region16: #{blurpool_conv2d.1} parent=11 // pred_fallthru
        _
      // Predicated region
      $region17: #{blurpool_conv2d.1} parent=11 // pred_check
        %p143 = pneg %p78
      $region18: #{blurpool_conv2d.1} parent=11 // pred_check_branch
        %145 = sbr.rel (%p143) target = $region20
      $region19: #{blurpool_conv2d.1} parent=11 // pred_region
        _
      $region20: #{blurpool_conv2d.1} parent=11 // pred_fallthru
        _
      // Predicated region
      $region21: #{blurpool_conv2d.1} parent=11 // pred_check
        %p146 = pneg %p99
      $region22: #{blurpool_conv2d.1} parent=11 // pred_check_branch
        %148 = sbr.rel (%p146) target = $region24
      $region23: #{blurpool_conv2d.1} parent=11 // pred_region
        _
      $region24: #{blurpool_conv2d.1} parent=11 // pred_fallthru
        _
    $region12: #{blurpool_conv2d.1} parent=5 // pred_fallthru
      _
    %p149 = scmp.lt.s32.totalorder %s10, 2
    // Predicated region
    $region25: #{blurpool_conv2d.1} parent=5 // pred_check
      %p150 = pneg %p149
    $region26: #{blurpool_conv2d.1} parent=5 // pred_check_branch
      %152 = sbr.rel (%p150) target = $region28
    $region27: #{blurpool_conv2d.1} parent=5 // pred_region
      // Predicated region
      $region29: #{blurpool_conv2d.1} parent=27 // pred_check
        %p153 = pneg %p30
      $region30: #{blurpool_conv2d.1} parent=27 // pred_check_branch
        %155 = sbr.rel (%p153) target = $region32
      $region31: #{blurpool_conv2d.1} parent=27 // pred_region
        %p156 = scmp.lt.s32.totalorder %s10, 1
        %s157 = scalar_select %p156, %s10, 1
        %s158 = smul.addr %s157, 2
        %s159 = smul.addr %s158, 8
        %s160 = scalar_lea.vmem %s0, %s159
      $region32: #{blurpool_conv2d.1} parent=27 // pred_fallthru
        _
    $region28: #{blurpool_conv2d.1} parent=5 // pred_fallthru
      _
    %p161 = scmp.le.s32.totalorder 1, %s10
    %p162 = scmp.lt.s32.totalorder %s10, 3
    %p163 = pnand %p161, %p162
    %p164 = pneg %p163
    // Predicated region
    $region33: #{blurpool_conv2d.1} parent=5 // pred_check
      _
    $region34: #{blurpool_conv2d.1} parent=5 // pred_check_branch
      %166 = sbr.rel (%p163) target = $region36
    $region35: #{blurpool_conv2d.1} parent=5 // pred_region
      %s167 = ssub.s32 %s10, 1
      %p168 = scmp.lt.s32.totalorder %s15, 1
      %s169 = scalar_select %p168, %s15, 1
      %s170 = smul.addr %s169, 2
      %s171 = smul.addr %s170, 8
      %s172 = scalar_lea.vmem %s0, %s171
      %p173 = pneg %p36
      %p174 = pneg %p33
      %p175 = pneg %p57
      %p176 = pneg %p54
      %p177 = pneg %p78
      %p178 = pneg %p75
      %p179 = pneg %p99
      %p180 = pneg %p96
      %p181 = pneg %p125
      %p182 = pneg %p122
      %p183 = scmp.lt.s32.totalorder %s15, 1
      %s184 = scalar_select %p183, %s15, 1
      %s185 = smul.addr %s184, 2
      %s186 = smul.addr %s185, 8
      %s187 = scalar_lea.vmem %s4, %s186
      %p188 = scmp.lt.s32.totalorder %s15, 1
      %s189 = scalar_select %p188, %s15, 1
      %s190 = smul.addr %s189, 2
      %s191 = smul.addr %s190, 8
      %s192 = scalar_lea.vmem %s0, %s191
      %p193 = scmp.lt.s32.totalorder %s15, 1
      %s194 = scalar_select %p193, %s15, 1
      %s195 = smul.addr %s194, 2
      %s196 = smul.addr %s195, 8
      %s197 = scalar_lea.vmem %s4, %s196
      %v198 = vld [vmem:[%s192] sm:$0xff]
      %v199 = vld [vmem:[%s192 + $0x8] sm:$0xff]
      %v200 = vld [vmem:[%s1] sm:$0xff]
      %v201 = vld [vmem:[%s1 + $0x8] sm:$0xff]
      %v202 = vld [vmem:[%s1 + $0x10] sm:$0xff]
      %v203 = vld [vmem:[%s1 + $0x18] sm:$0xff]
      %v204 = vld [vmem:[%s1 + $0x20] sm:$0xff]
      %v205 = vld [vmem:[%s1 + $0x28] sm:$0xff]
      %v206 = vld [vmem:[%s1 + $0x30] sm:$0xff]
      %v207 = vld [vmem:[%s1 + $0x38] sm:$0xff]
      %v208 = vld [vmem:[%s1 + $0x40] sm:$0xff]
      %v209 = vld [vmem:[%s1 + $0x48] sm:$0xff]
      %v210 = vld [vmem:[%s1 + $0x50] sm:$0xff]
      %v211 = vld [vmem:[%s1 + $0x58] sm:$0xff]
      %v212 = vld [vmem:[%s1 + $0x60] sm:$0xff]
      %v213 = vld [vmem:[%s1 + $0x68] sm:$0xff]
      %v214 = vld [vmem:[%s1 + $0x70] sm:$0xff]
      %v215 = vld [vmem:[%s1 + $0x78] sm:$0xff]
      %v216 = vld [vmem:[%s1 + $0x80] sm:$0xff]
      %v217 = vld [vmem:[%s1 + $0x88] sm:$0xff]
      %v218 = vld [vmem:[%s1 + $0x90] sm:$0xff]
      %v219 = vld [vmem:[%s1 + $0x98] sm:$0xff]
      %v220 = vld [vmem:[%s1 + $0xa0] sm:$0xff]
      %v221 = vld [vmem:[%s1 + $0xa8] sm:$0xff]
      %v222 = vld [vmem:[%s1 + $0xb0] sm:$0xff]
      %v223 = vld [vmem:[%s1 + $0xb8] sm:$0xff]
      %vm224 = vcmask 523264
      %v226 = vsel %vm224, %v198, 0
      %v229 = vsel %vm224, %v199, 0
      %231 = vmatprep.subr.mxu0 %v201
      %232 = vmatpush1.msra.mxu0 %v200
      %233 = vmatprep.subr.mxu0 %v204
      %234 = vmatpush1.msra.mxu0 %v203
      %235 = vmatprep.subr.mxu0 %v207
      %236 = vmatpush1.msra.mxu0 %v206
      %237 = vmatprep.subr.mxu0 %v210
      %238 = vmatpush1.msra.mxu0 %v209
      %239 = vmatprep.subr.mxu0 %v213
      %240 = vmatpush1.msra.mxu0 %v212
      %241 = vmatprep.subr.mxu0 %v216
      %242 = vmatpush1.msra.mxu0 %v215
      %243 = vmatprep.subr.mxu0 %v219
      %244 = vmatpush1.msra.mxu0 %v218
      %245 = vmatprep.subr.mxu0 %v222
      %246 = vmatpush1.msra.mxu0 %v221
      %247 = vmatprep.subr.mxu0 0.0
      %248 = vmatpush1.msra.mxu0 0.0
      %249 = vmatprep.subr.mxu0 0.0
      %250 = vmatpush1.msra.mxu0 0.0
      %251 = vmatprep.subr.mxu0 0.0
      %252 = vmatpush1.msra.mxu0 0.0
      %253 = vmatprep.subr.mxu0 0.0
      %254 = vmatpush1.msra.mxu0 0.0
      %255 = vmatprep.subr.mxu0 0.0
      %256 = vmatpush1.msra.mxu0 0.0
      %257 = vmatprep.subr.mxu0 0.0
      %258 = vmatpush1.msra.mxu0 0.0
      %259 = vmatprep.subr.mxu0 0.0
      %260 = vmatpush1.msra.mxu0 0.0
      %261 = vmatprep.subr.mxu0 0.0
      %262 = vmatpush1.msra.mxu0 0.0
      %263 = vmatprep.subr.mxu0 0.0
      %264 = vmatpush1.msra.mxu0 0.0
      %265 = vmatprep.subr.mxu0 0.0
      %266 = vmatpush1.msra.mxu0 0.0
      %267 = vmatprep.subr.mxu0 0.0
      %268 = vmatpush1.msra.mxu0 0.0
      %269 = vmatprep.subr.mxu0 0.0
      %270 = vmatpush1.msra.mxu0 0.0
      %271 = vmatprep.subr.mxu0 0.0
      %272 = vmatpush1.msra.mxu0 0.0
      %273 = vmatprep.subr.mxu0 0.0
      %274 = vmatpush1.msra.mxu0 0.0
      %275 = vmatprep.subr.mxu0 0.0
      %276 = vmatpush1.msra.mxu0 0.0
      %277 = vmatprep.subr.mxu0 0.0
      %278 = vmatpush1.msra.mxu0 0.0
      %279 = vmatprep.subr.mxu0 0.0
      %280 = vmatpush1.msra.mxu0 0.0
      %281 = vmatprep.subr.mxu0 0.0
      %282 = vmatpush1.msra.mxu0 0.0
      %283 = vmatprep.subr.mxu0 0.0
      %284 = vmatpush1.msra.mxu0 0.0
      %285 = vmatprep.subr.mxu0 0.0
      %286 = vmatpush1.msra.mxu0 0.0
      %287 = vmatprep.subr.mxu0 0.0
      %288 = vmatpush1.msra.mxu0 0.0
      %289 = vmatprep.subr.mxu0 0.0
      %290 = vmatpush1.msra.mxu0 0.0
      %291 = vmatprep.subr.mxu0 0.0
      %292 = vmatpush1.msra.mxu0 0.0
      %293 = vmatprep.subr.mxu0 0.0
      %294 = vmatpush1.msra.mxu0 0.0
      %295 = vmatprep.mubr.f32.mxu0 0.0
      %296 = vmatmul.mubr.f32.gmra.mrb[0].mxu0 %v226
      %v297 = vpop.f32.mrb[0].mxu0
      %v298 = vadd.f32 0.0, %v297
      %v299 = vpop.f32.mrb[0].mxu0
      %v300 = vadd.f32 0.0, %v299
      %301 = vmatprep.mubr.f32.mxu0 0.0
      %302 = vmatmul.mubr.f32.gmra.mrb[0].mxu0 %v229
      %v303 = vpop.f32.mrb[0].mxu0
      %v304 = vadd.f32 0.0, %v303
      %v305 = vpop.f32.mrb[0].mxu0
      %v306 = vadd.f32 0.0, %v305
      %307 = vdwg.mxu0
      %308 = vmatprep.subr.mxu0 0.0
      %309 = vmatpush1.msra.mxu0 %v202
      %310 = vmatprep.subr.mxu0 0.0
      %311 = vmatpush1.msra.mxu0 %v205
      %312 = vmatprep.subr.mxu0 0.0
      %313 = vmatpush1.msra.mxu0 %v208
      %314 = vmatprep.subr.mxu0 0.0
      %315 = vmatpush1.msra.mxu0 %v211
      %316 = vmatprep.subr.mxu0 0.0
      %317 = vmatpush1.msra.mxu0 %v214
      %318 = vmatprep.subr.mxu0 0.0
      %319 = vmatpush1.msra.mxu0 %v217
      %320 = vmatprep.subr.mxu0 0.0
      %321 = vmatpush1.msra.mxu0 %v220
      %322 = vmatprep.subr.mxu0 0.0
      %323 = vmatpush1.msra.mxu0 %v223
      %324 = vmatprep.subr.mxu0 0.0
      %325 = vmatpush1.msra.mxu0 0.0
      %326 = vmatprep.subr.mxu0 0.0
      %327 = vmatpush1.msra.mxu0 0.0
      %328 = vmatprep.subr.mxu0 0.0
      %329 = vmatpush1.msra.mxu0 0.0
      %330 = vmatprep.subr.mxu0 0.0
      %331 = vmatpush1.msra.mxu0 0.0
      %332 = vmatprep.subr.mxu0 0.0
      %333 = vmatpush1.msra.mxu0 0.0
      %334 = vmatprep.subr.mxu0 0.0
      %335 = vmatpush1.msra.mxu0 0.0
      %336 = vmatprep.subr.mxu0 0.0
      %337 = vmatpush1.msra.mxu0 0.0
      %338 = vmatprep.subr.mxu0 0.0
      %339 = vmatpush1.msra.mxu0 0.0
      %340 = vmatprep.subr.mxu0 0.0
      %341 = vmatpush1.msra.mxu0 0.0
      %342 = vmatprep.subr.mxu0 0.0
      %343 = vmatpush1.msra.mxu0 0.0
      %344 = vmatprep.subr.mxu0 0.0
      %345 = vmatpush1.msra.mxu0 0.0
      %346 = vmatprep.subr.mxu0 0.0
      %347 = vmatpush1.msra.mxu0 0.0
      %348 = vmatprep.subr.mxu0 0.0
      %349 = vmatpush1.msra.mxu0 0.0
      %350 = vmatprep.subr.mxu0 0.0
      %351 = vmatpush1.msra.mxu0 0.0
      %352 = vmatprep.subr.mxu0 0.0
      %353 = vmatpush1.msra.mxu0 0.0
      %354 = vmatprep.subr.mxu0 0.0
      %355 = vmatpush1.msra.mxu0 0.0
      %356 = vmatprep.subr.mxu0 0.0
      %357 = vmatpush1.msra.mxu0 0.0
      %358 = vmatprep.subr.mxu0 0.0
      %359 = vmatpush1.msra.mxu0 0.0
      %360 = vmatprep.subr.mxu0 0.0
      %361 = vmatpush1.msra.mxu0 0.0
      %362 = vmatprep.subr.mxu0 0.0
      %363 = vmatpush1.msra.mxu0 0.0
      %364 = vmatprep.subr.mxu0 0.0
      %365 = vmatpush1.msra.mxu0 0.0
      %366 = vmatprep.subr.mxu0 0.0
      %367 = vmatpush1.msra.mxu0 0.0
      %368 = vmatprep.subr.mxu0 0.0
      %369 = vmatpush1.msra.mxu0 0.0
      %370 = vmatprep.subr.mxu0 0.0
      %371 = vmatpush1.msra.mxu0 0.0
      %372 = vmatprep.mubr.f32.mxu0 0.0
      %373 = vmatmul.mubr.f32.gmra.mrb[0].mxu0 %v226
      %v374 = vpop.f32.mrb[0].mxu0
      %v375 = vadd.f32 0.0, %v374
      %v376 = vpop.f32.mrb[0].mxu0
      %377 = vmatprep.mubr.f32.mxu0 0.0
      %378 = vmatmul.mubr.f32.gmra.mrb[0].mxu0 %v229
      %v379 = vpop.f32.mrb[0].mxu0
      %v380 = vadd.f32 0.0, %v379
      %v381 = vpop.f32.mrb[0].mxu0
      %382 = vdwg.mxu0
      %v383 = vld [vmem:[%s3] sm:$0x1]
      %v384 = vld [vmem:[%s2] sm:$0xff]
      %v385 = vld [vmem:[%s2 + $0x8] sm:$0xff]
      %s386 = scalar_lea.vmem %s2, 16
      %v387 = vld [vmem:[%s386] sm:$0xff]
      %v388 = vld [vmem:[%s386 + $0x8] sm:$0xff]
      %s389 = scalar_lea.vmem %s2, 32
      %v390 = vld [vmem:[%s389] sm:$0xff]
      %v391 = vld [vmem:[%s389 + $0x8] sm:$0xff]
      %vm392 = vcmask 130048
      %v394 = vsel %vm392, %v387, 0
      %v397 = vsel %vm392, %v388, 0
      %399 = vmatprep.subr.mxu0 0.0
      %400 = vmatpush1.msra.mxu0 %v300
      %401 = vmatprep.subr.mxu0 0.0
      %402 = vmatpush1.msra.mxu0 %v306
      %403 = vmatprep.subr.mxu0 0.0
      %404 = vmatpush1.msra.mxu0 0.0
      %405 = vmatprep.subr.mxu0 0.0
      %406 = vmatpush1.msra.mxu0 0.0
      %407 = vmatprep.subr.mxu0 0.0
      %408 = vmatpush1.msra.mxu0 0.0
      %409 = vmatprep.subr.mxu0 0.0
      %410 = vmatpush1.msra.mxu0 0.0
      %411 = vmatprep.subr.mxu0 0.0
      %412 = vmatpush1.msra.mxu0 0.0
      %413 = vmatprep.subr.mxu0 0.0
      %414 = vmatpush1.msra.mxu0 0.0
      %415 = vmatprep.subr.mxu0 0.0
      %416 = vmatpush1.msra.mxu0 0.0
      %417 = vmatprep.subr.mxu0 0.0
      %418 = vmatpush1.msra.mxu0 0.0
      %419 = vmatprep.subr.mxu0 0.0
      %420 = vmatpush1.msra.mxu0 0.0
      %421 = vmatprep.subr.mxu0 0.0
      %422 = vmatpush1.msra.mxu0 0.0
      %423 = vmatprep.subr.mxu0 0.0
      %424 = vmatpush1.msra.mxu0 0.0
      %425 = vmatprep.subr.mxu0 0.0
      %426 = vmatpush1.msra.mxu0 0.0
      %427 = vmatprep.subr.mxu0 0.0
      %428 = vmatpush1.msra.mxu0 0.0
      %429 = vmatprep.subr.mxu0 0.0
      %430 = vmatpush1.msra.mxu0 0.0
      %431 = vmatprep.subr.mxu0 0.0
      %432 = vmatpush1.msra.mxu0 0.0
      %433 = vmatprep.subr.mxu0 0.0
      %434 = vmatpush1.msra.mxu0 0.0
      %435 = vmatprep.subr.mxu0 0.0
      %436 = vmatpush1.msra.mxu0 0.0
      %437 = vmatprep.subr.mxu0 0.0
      %438 = vmatpush1.msra.mxu0 0.0
      %439 = vmatprep.subr.mxu0 0.0
      %440 = vmatpush1.msra.mxu0 0.0
      %441 = vmatprep.subr.mxu0 0.0
      %442 = vmatpush1.msra.mxu0 0.0
      %443 = vmatprep.subr.mxu0 0.0
      %444 = vmatpush1.msra.mxu0 0.0
      %445 = vmatprep.subr.mxu0 0.0
      %446 = vmatpush1.msra.mxu0 0.0
      %447 = vmatprep.subr.mxu0 0.0
      %448 = vmatpush1.msra.mxu0 0.0
      %449 = vmatprep.subr.mxu0 0.0
      %450 = vmatpush1.msra.mxu0 0.0
      %451 = vmatprep.subr.mxu0 0.0
      %452 = vmatpush1.msra.mxu0 0.0
      %453 = vmatprep.subr.mxu0 0.0
      %454 = vmatpush1.msra.mxu0 0.0
      %455 = vmatprep.subr.mxu0 0.0
      %456 = vmatpush1.msra.mxu0 0.0
      %457 = vmatprep.subr.mxu0 0.0
      %458 = vmatpush1.msra.mxu0 0.0
      %459 = vmatprep.subr.mxu0 0.0
      %460 = vmatpush1.msra.mxu0 0.0
      %461 = vmatprep.subr.mxu0 0.0
      %462 = vmatpush1.msra.mxu0 0.0
      %463 = vmatprep.mubr.f32.mxu0 0.0
      %464 = vmatmul.mubr.f32.gmra.mrb[0].mxu0 %v394
      %v465 = vpop.f32.mrb[0].mxu0
      %v466 = vadd.f32 0.0, %v465
      %v467 = vpop.f32.mrb[0].mxu0
      %468 = vmatprep.mubr.f32.mxu0 0.0
      %469 = vmatmul.mubr.f32.gmra.mrb[0].mxu0 %v397
      %v470 = vpop.f32.mrb[0].mxu0
      %v471 = vadd.f32 0.0, %v470
      %v472 = vpop.f32.mrb[0].mxu0
      %473 = vdwg.mxu0
      %v475 = vsel %vm392, %v384, 0
      %v478 = vsel %vm392, %v385, 0
      %480 = vmatprep.subr.mxu0 0.0
      %481 = vmatpush1.msra.mxu0 %v298
      %482 = vmatprep.subr.mxu0 0.0
      %483 = vmatpush1.msra.mxu0 %v304
      %484 = vmatprep.subr.mxu0 0.0
      %485 = vmatpush1.msra.mxu0 0.0
      %486 = vmatprep.subr.mxu0 0.0
      %487 = vmatpush1.msra.mxu0 0.0
      %488 = vmatprep.subr.mxu0 0.0
      %489 = vmatpush1.msra.mxu0 0.0
      %490 = vmatprep.subr.mxu0 0.0
      %491 = vmatpush1.msra.mxu0 0.0
      %492 = vmatprep.subr.mxu0 0.0
      %493 = vmatpush1.msra.mxu0 0.0
      %494 = vmatprep.subr.mxu0 0.0
      %495 = vmatpush1.msra.mxu0 0.0
      %496 = vmatprep.subr.mxu0 0.0
      %497 = vmatpush1.msra.mxu0 0.0
      %498 = vmatprep.subr.mxu0 0.0
      %499 = vmatpush1.msra.mxu0 0.0
      %500 = vmatprep.subr.mxu0 0.0
      %501 = vmatpush1.msra.mxu0 0.0
      %502 = vmatprep.subr.mxu0 0.0
      %503 = vmatpush1.msra.mxu0 0.0
      %504 = vmatprep.subr.mxu0 0.0
      %505 = vmatpush1.msra.mxu0 0.0
      %506 = vmatprep.subr.mxu0 0.0
      %507 = vmatpush1.msra.mxu0 0.0
      %508 = vmatprep.subr.mxu0 0.0
      %509 = vmatpush1.msra.mxu0 0.0
      %510 = vmatprep.subr.mxu0 0.0
      %511 = vmatpush1.msra.mxu0 0.0
      %512 = vmatprep.subr.mxu0 0.0
      %513 = vmatpush1.msra.mxu0 0.0
      %514 = vmatprep.subr.mxu0 0.0
      %515 = vmatpush1.msra.mxu0 0.0
      %516 = vmatprep.subr.mxu0 0.0
      %517 = vmatpush1.msra.mxu0 0.0
      %518 = vmatprep.subr.mxu0 0.0
      %519 = vmatpush1.msra.mxu0 0.0
      %520 = vmatprep.subr.mxu0 0.0
      %521 = vmatpush1.msra.mxu0 0.0
      %522 = vmatprep.subr.mxu0 0.0
      %523 = vmatpush1.msra.mxu0 0.0
      %524 = vmatprep.subr.mxu0 0.0
      %525 = vmatpush1.msra.mxu0 0.0
      %526 = vmatprep.subr.mxu0 0.0
      %527 = vmatpush1.msra.mxu0 0.0
      %528 = vmatprep.subr.mxu0 0.0
      %529 = vmatpush1.msra.mxu0 0.0
      %530 = vmatprep.subr.mxu0 0.0
      %531 = vmatpush1.msra.mxu0 0.0
      %532 = vmatprep.subr.mxu0 0.0
      %533 = vmatpush1.msra.mxu0 0.0
      %534 = vmatprep.subr.mxu0 0.0
      %535 = vmatpush1.msra.mxu0 0.0
      %536 = vmatprep.subr.mxu0 0.0
      %537 = vmatpush1.msra.mxu0 0.0
      %538 = vmatprep.subr.mxu0 0.0
      %539 = vmatpush1.msra.mxu0 0.0
      %540 = vmatprep.subr.mxu0 0.0
      %541 = vmatpush1.msra.mxu0 0.0
      %542 = vmatprep.subr.mxu0 0.0
      %543 = vmatpush1.msra.mxu0 0.0
      %544 = vmatprep.mubr.f32.mxu0 0.0
      %545 = vmatmul.mubr.f32.gmra.mrb[0].mxu0 %v475
      %v546 = vpop.f32.mrb[0].mxu0
      %v547 = vadd.f32 %v466, %v546
      %v548 = vpop.f32.mrb[0].mxu0
      %549 = vmatprep.mubr.f32.mxu0 0.0
      %550 = vmatmul.mubr.f32.gmra.mrb[0].mxu0 %v478
      %v551 = vpop.f32.mrb[0].mxu0
      %v552 = vadd.f32 %v471, %v551
      %v553 = vpop.f32.mrb[0].mxu0
      %554 = vdwg.mxu0
      %v556 = vsel %vm392, %v390, 0
      %v559 = vsel %vm392, %v391, 0
      %561 = vmatprep.subr.mxu0 0.0
      %562 = vmatpush1.msra.mxu0 %v375
      %563 = vmatprep.subr.mxu0 0.0
      %564 = vmatpush1.msra.mxu0 %v380
      %565 = vmatprep.subr.mxu0 0.0
      %566 = vmatpush1.msra.mxu0 0.0
      %567 = vmatprep.subr.mxu0 0.0
      %568 = vmatpush1.msra.mxu0 0.0
      %569 = vmatprep.subr.mxu0 0.0
      %570 = vmatpush1.msra.mxu0 0.0
      %571 = vmatprep.subr.mxu0 0.0
      %572 = vmatpush1.msra.mxu0 0.0
      %573 = vmatprep.subr.mxu0 0.0
      %574 = vmatpush1.msra.mxu0 0.0
      %575 = vmatprep.subr.mxu0 0.0
      %576 = vmatpush1.msra.mxu0 0.0
      %577 = vmatprep.subr.mxu0 0.0
      %578 = vmatpush1.msra.mxu0 0.0
      %579 = vmatprep.subr.mxu0 0.0
      %580 = vmatpush1.msra.mxu0 0.0
      %581 = vmatprep.subr.mxu0 0.0
      %582 = vmatpush1.msra.mxu0 0.0
      %583 = vmatprep.subr.mxu0 0.0
      %584 = vmatpush1.msra.mxu0 0.0
      %585 = vmatprep.subr.mxu0 0.0
      %586 = vmatpush1.msra.mxu0 0.0
      %587 = vmatprep.subr.mxu0 0.0
      %588 = vmatpush1.msra.mxu0 0.0
      %589 = vmatprep.subr.mxu0 0.0
      %590 = vmatpush1.msra.mxu0 0.0
      %591 = vmatprep.subr.mxu0 0.0
      %592 = vmatpush1.msra.mxu0 0.0
      %593 = vmatprep.subr.mxu0 0.0
      %594 = vmatpush1.msra.mxu0 0.0
      %595 = vmatprep.subr.mxu0 0.0
      %596 = vmatpush1.msra.mxu0 0.0
      %597 = vmatprep.subr.mxu0 0.0
      %598 = vmatpush1.msra.mxu0 0.0
      %599 = vmatprep.subr.mxu0 0.0
      %600 = vmatpush1.msra.mxu0 0.0
      %601 = vmatprep.subr.mxu0 0.0
      %602 = vmatpush1.msra.mxu0 0.0
      %603 = vmatprep.subr.mxu0 0.0
      %604 = vmatpush1.msra.mxu0 0.0
      %605 = vmatprep.subr.mxu0 0.0
      %606 = vmatpush1.msra.mxu0 0.0
      %607 = vmatprep.subr.mxu0 0.0
      %608 = vmatpush1.msra.mxu0 0.0
      %609 = vmatprep.subr.mxu0 0.0
      %610 = vmatpush1.msra.mxu0 0.0
      %611 = vmatprep.subr.mxu0 0.0
      %612 = vmatpush1.msra.mxu0 0.0
      %613 = vmatprep.subr.mxu0 0.0
      %614 = vmatpush1.msra.mxu0 0.0
      %615 = vmatprep.subr.mxu0 0.0
      %616 = vmatpush1.msra.mxu0 0.0
      %617 = vmatprep.subr.mxu0 0.0
      %618 = vmatpush1.msra.mxu0 0.0
      %619 = vmatprep.subr.mxu0 0.0
      %620 = vmatpush1.msra.mxu0 0.0
      %621 = vmatprep.subr.mxu0 0.0
      %622 = vmatpush1.msra.mxu0 0.0
      %623 = vmatprep.subr.mxu0 0.0
      %624 = vmatpush1.msra.mxu0 0.0
      %625 = vmatprep.mubr.f32.mxu0 0.0
      %626 = vmatmul.mubr.f32.gmra.mrb[0].mxu0 %v556
      %v627 = vpop.f32.mrb[0].mxu0
      %v628 = vadd.f32 0.0, %v627
      %v629 = vpop.f32.mrb[0].mxu0
      %630 = vmatprep.mubr.f32.mxu0 0.0
      %631 = vmatmul.mubr.f32.gmra.mrb[0].mxu0 %v559
      %v632 = vpop.f32.mrb[0].mxu0
      %v633 = vadd.f32 0.0, %v632
      %v634 = vpop.f32.mrb[0].mxu0
      %635 = vdwg.mxu0
      %v636 = vadd.f32 %v547, %v628
      %v637 = vadd.f32 %v552, %v633
      %v639 = vlaneseq
      %v640 = vshrl.u32 %v639, 7
      %v641 = vsub.s32 0, %v640
      %v642 = vrot.slane %v383, %v641
      %v644 = vadd.f32 %v636, %v642
      %v645 = vadd.f32 %v637, %v642
      %646 = vst [vmem:[%s197] sm:$0xff] %v644
      %647 = vst [vmem:[%s197 + $0x8] sm:$0xff] %v645
      %p648 = scmp.lt.s32.totalorder %s15, 1
      %s649 = scalar_select %p648, %s15, 1
      %s650 = smul.addr %s649, 2
      %s651 = smul.addr %s650, 8
      %s652 = scalar_lea.vmem %s4, %s651
      // Predicated region
      $region37: #{blurpool_conv2d.1} parent=35 // pred_check
        %p653 = pneg %p122
      $region38: #{blurpool_conv2d.1} parent=35 // pred_check_branch
        %655 = sbr.rel (%p653) target = $region40
      $region39: #{blurpool_conv2d.1} parent=35 // pred_region
        _
      $region40: #{blurpool_conv2d.1} parent=35 // pred_fallthru
        _
    $region36: #{blurpool_conv2d.1} parent=5 // pred_fallthru
      _
    %p656 = scmp.le.s32.totalorder 2, %s10
    // Predicated region
    $region41: #{blurpool_conv2d.1} parent=5 // pred_check
      %p657 = pneg %p656
    $region42: #{blurpool_conv2d.1} parent=5 // pred_check_branch
      %659 = sbr.rel (%p657) target = $region44
    $region43: #{blurpool_conv2d.1} parent=5 // pred_region
      %s660 = ssub.s32 %s10, 2
      // Predicated region
      $region45: #{blurpool_conv2d.1} parent=43 // pred_check
        %p661 = pneg %p128
      $region46: #{blurpool_conv2d.1} parent=43 // pred_check_branch
        %663 = sbr.rel (%p661) target = $region48
      $region47: #{blurpool_conv2d.1} parent=43 // pred_region
        %p664 = scmp.lt.s32.totalorder %s16, 1
        %s665 = scalar_select %p664, %s16, 1
        %s666 = smul.addr %s665, 2
        %s667 = smul.addr %s666, 8
        %s668 = scalar_lea.vmem %s4, %s667
      $region48: #{blurpool_conv2d.1} parent=43 // pred_fallthru
        _
    $region44: #{blurpool_conv2d.1} parent=5 // pred_fallthru
      _
  $region6: #{blurpool_conv2d.1} parent=0 // loop_footer
    %s14 = sadd.s32 1, %s10
  $region7: #{blurpool_conv2d.1} parent=0 // loop_footer_branch
    %9 = sbr.rel target = $region3
  $region8: #{blurpool_conv2d.1} parent=0 // loop_exit
    _

</llo_original>
